<compile_context>
chip_gen: v7x
topology: tpu7x:2x2x1
jax: 0.10.0
libtpu: 0.0.40
codegen_flags: <defaults>
</compile_context>

<pallas_src>
import math
from functools import partial

import jax
import jax.numpy as jnp
from jax.experimental import pallas as pl
from jax.experimental.pallas import tpu as pltpu

LRELU_SLOPE = 0.2
LRELU_GAIN = math.sqrt(2.0)   # StyleGAN bias_act def_gain for 'lrelu'
LANE = 128
SUBLANE = 8


def _round_up(x, m):
    return (x + m - 1) // m * m


def _lrelu(x):
    return jnp.where(x >= 0.0, x, LRELU_SLOPE * x) * LRELU_GAIN


# -----------------------------------------------------------------------------
# Kernel: PixelNorm + (num_hidden + 1) equalized-LR Linear+lrelu layers, fused.
# -----------------------------------------------------------------------------
def mapping_kernel(z_ref, w0_ref, ws_ref, b_ref, out_ref,
                   *, latent_dim, num_hidden):
    # ---- PixelNorm over the (true, unpadded) feature axis ----
    z = z_ref[...].astype(jnp.float32)
    # Divide by the true latent_dim: padded lanes of z are zero, so the sum is
    # unaffected, but jnp.mean over the padded width would dilute the norm.
    mean_sq = jnp.sum(z * z, axis=1, keepdims=True) * (1.0 / latent_dim)
    denom = jnp.sqrt(mean_sq) + 1e-8
    x = z * pl.reciprocal(denom, approx=True)     # EUP; frees VALU slots

    w_dtype = w0_ref.dtype

    # ---- First equalized-LR Linear (weights pre-scaled, pre-transposed) ----
    x = jnp.dot(x.astype(w_dtype), w0_ref[...],
                preferred_element_type=jnp.float32)
    x = _lrelu(x + b_ref[0])                      # bias row [1, style_pad], f32

    # ---- Remaining Linears (small static unroll: LLO sees the full chain) ----
    for l in range(num_hidden):
        x = jnp.dot(x.astype(w_dtype), ws_ref[l],
                    preferred_element_type=jnp.float32)
        x = _lrelu(x + b_ref[l + 1])

    out_ref[...] = x.astype(out_ref.dtype)        # lane-dense unmasked store


# -----------------------------------------------------------------------------
# Parameter prep (scale-fold, transpose, lane-pad, optional bf16)
# -----------------------------------------------------------------------------
def prepare_mapping_params(w0, b0, ws, bs, *, gain=1.0,
                           weight_dtype=jnp.float32):
    style_dim, latent_dim = w0.shape
    num_hidden = ws.shape[0]
    assert num_hidden >= 1, "expects num_layers >= 2"

    lat_p = _round_up(latent_dim, LANE)
    sty_p = _round_up(style_dim, LANE)

    # Fold the equalized-LR scale and transpose to [in, out] once (layout
    # plumbing in the wrapper; nothing recomputed per grid step).
    w0t = (w0.astype(jnp.float32) * (gain * latent_dim ** -0.5)).T       # [lat, sty]
    wst = jnp.swapaxes(
        ws.astype(jnp.float32) * (gain * style_dim ** -0.5), -1, -2)      # [L-1, in, out]

    w0p = jnp.zeros((lat_p, sty_p), weight_dtype)
    w0p = w0p.at[:latent_dim, :style_dim].set(w0t.astype(weight_dtype))
    wsp = jnp.zeros((num_hidden, sty_p, sty_p), weight_dtype)
    wsp = wsp.at[:, :style_dim, :style_dim].set(wst.astype(weight_dtype))

    # All biases packed into one resident buffer; stay f32 (elementwise math
    # is kept f32 — v5e has no bf16 VPU).
    b_all = jnp.zeros((num_hidden + 1, 1, sty_p), jnp.float32)
    b_all = b_all.at[0, 0, :style_dim].set(b0.astype(jnp.float32))
    b_all = b_all.at[1:, 0, :style_dim].set(bs.astype(jnp.float32))

    return dict(w0=w0p, ws=wsp, b=b_all,
                latent_dim=latent_dim, style_dim=style_dim,
                num_hidden=num_hidden)


# -----------------------------------------------------------------------------
# Wrapper
# -----------------------------------------------------------------------------
def mapping_network(z, w0, b0, ws, bs, *, gain=1.0,
                    weight_dtype=jnp.float32, batch_tile=256):
    params = prepare_mapping_params(w0, b0, ws, bs, gain=gain,
                                    weight_dtype=weight_dtype)
    B, latent_dim = z.shape
    style_dim = params["style_dim"]
    num_hidden = params["num_hidden"]
    lat_p, sty_p = params["w0"].shape

    # Batch tile: multiple of 8 sublanes, clamped to the (padded) batch.
    tb = max(SUBLANE, min(_round_up(batch_tile, SUBLANE), _round_up(B, SUBLANE)))
    b_pad = _round_up(B, tb)

    z_p = jnp.zeros((b_pad, lat_p), jnp.float32).at[:B, :latent_dim].set(
        z.astype(jnp.float32))

    kernel = partial(mapping_kernel, latent_dim=latent_dim,
                     num_hidden=num_hidden)

    # VMEM budget: resident weights/biases + double-buffered z/out tiles,
    # with generous headroom; capped well under v7x's 64 MiB.
    itemsize = jnp.dtype(weight_dtype).itemsize
    weight_bytes = (params["w0"].size + params["ws"].size) * itemsize
    bias_bytes = params["b"].size * 4
    act_bytes = 2 * (tb * lat_p + tb * sty_p) * 4
    vmem_limit = int(min(56 * 1024 * 1024,
                         max(8 * 1024 * 1024,
                             4 * (weight_bytes + bias_bytes + act_bytes))))

    out = pl.pallas_call(
        kernel,
        out_shape=jax.ShapeDtypeStruct((b_pad, sty_p), jnp.float32),
        grid_spec=pltpu.PrefetchScalarGridSpec(
            num_scalar_prefetch=0,
            grid=(b_pad // tb,),
            in_specs=[
                pl.BlockSpec((tb, lat_p), lambda i: (i, 0)),           # z tile
                pl.BlockSpec((lat_p, sty_p), lambda i: (0, 0)),        # w0 (resident)
                pl.BlockSpec((num_hidden, sty_p, sty_p),
                             lambda i: (0, 0, 0)),                     # ws (resident)
                pl.BlockSpec((num_hidden + 1, 1, sty_p),
                             lambda i: (0, 0, 0)),                     # biases
            ],
            out_specs=pl.BlockSpec((tb, sty_p), lambda i: (i, 0)),     # lane-dense
        ),
        compiler_params=pltpu.CompilerParams(
            dimension_semantics=("parallel",),
            vmem_limit_bytes=vmem_limit,
        ),
    )(z_p, params["w0"], params["ws"], params["b"])

    return out[:B, :style_dim]


# -----------------------------------------------------------------------------
# Pure-JAX reference mirroring the PyTorch module (eval, psi=1)
# -----------------------------------------------------------------------------
def mapping_reference(z, w0, b0, ws, bs, *, gain=1.0):
    latent_dim = z.shape[1]
    style_dim = w0.shape[0]
    x = z / (jnp.sqrt(jnp.mean(z * z, axis=1, keepdims=True)) + 1e-8)

    def layer(x, w, b, in_feat):
        y = jnp.dot(x, (w * (gain * in_feat ** -0.5)).T,
                    precision=jax.lax.Precision.HIGHEST)
        y = y + b[None, :]
        return jnp.where(y >= 0, y, LRELU_SLOPE * y) * LRELU_GAIN

    x = layer(x, w0, b0, latent_dim)
    for l in range(ws.shape[0]):
        x = layer(x, ws[l], bs[l], style_dim)
    return x


if __name__ == "__main__":
    # Small, MappingNetwork-consistent shapes (grid of 3 batch tiles).
    B = 24
    latent_dim = 32
    style_dim = 32
    num_layers = 4
    gain = 1.0

    key = jax.random.PRNGKey(0)
    kz, k0, krest = jax.random.split(key, 3)

    z = jax.random.normal(kz, (B, latent_dim), dtype=jnp.float32)
    # Parameters: weight ~ randn(out, in), bias = zeros (as in module __init__).
    w0 = jax.random.normal(k0, (style_dim, latent_dim), dtype=jnp.float32)
    b0 = jnp.zeros((style_dim,), dtype=jnp.float32)
    ws = jax.random.normal(krest, (num_layers - 1, style_dim, style_dim),
                           dtype=jnp.float32)
    bs = jnp.zeros((num_layers - 1, style_dim), dtype=jnp.float32)

    ref = mapping_reference(z, w0, b0, ws, bs, gain=gain)

    # f32 resident weights (approx EUP reciprocal -> slightly loosened tol).
    out = mapping_network(z, w0, b0, ws, bs, gain=gain,
                          weight_dtype=jnp.float32, batch_tile=8)
    out = jax.block_until_ready(out)
    assert out.shape == (B, style_dim)
    assert jnp.allclose(out, ref, atol=1e-2, rtol=1e-2), "f32 mismatch vs reference"

    # bf16 resident weights (halved weight DMA); loose tol covers quantization.
    out_bf16 = mapping_network(z, w0, b0, ws, bs, gain=gain,
                               weight_dtype=jnp.bfloat16, batch_tile=8)
    out_bf16 = jax.block_until_ready(out_bf16)
    assert jnp.allclose(out_bf16, ref, atol=5e-2, rtol=5e-2), "bf16 mismatch vs reference"

    print("KERNEL_OK")
</pallas_src>

<mosaic_0001>
module attributes {stable_mosaic.version = 11 : i64} {
  func.func @mapping_kernel(%arg0: i32, %arg1: memref<8x128xf32, #tpu.memory_space<vmem>>, %arg2: memref<128x128xf32, #tpu.memory_space<vmem>>, %arg3: memref<3x128x128xf32, #tpu.memory_space<vmem>>, %arg4: memref<4x1x128xf32, #tpu.memory_space<vmem>>, %arg5: memref<8x128xf32, #tpu.memory_space<vmem>>) attributes {dimension_semantics = [#tpu.dimension_semantics<parallel>], iteration_bounds = array<i64: 3>, scalar_prefetch = 0 : i64, scratch_operands = 0 : i64, tpu.core_type = #tpu.core_type<tc>, window_params = [{transform_indices = @transform_0, window_bounds = array<i64: 8, 128>}, {pipeline_mode = #tpu.pipeline_mode<synchronous>, transform_indices = @transform_1, window_bounds = array<i64: 128, 128>}, {pipeline_mode = #tpu.pipeline_mode<synchronous>, transform_indices = @transform_2, window_bounds = array<i64: 3, 128, 128>}, {pipeline_mode = #tpu.pipeline_mode<synchronous>, transform_indices = @transform_3, window_bounds = array<i64: 4, 1, 128>}, {transform_indices = @transform_4, window_bounds = array<i64: 8, 128>}]} {
    %c0 = arith.constant 0 : index
    %c0_0 = arith.constant 0 : index
    %0 = vector.load %arg1[%c0, %c0_0] : memref<8x128xf32, #tpu.memory_space<vmem>>, vector<8x128xf32>
    %1 = arith.mulf %0, %0 : vector<8x128xf32>
    %cst = arith.constant dense<0.000000e+00> : vector<8xf32>
    %2 = vector.multi_reduction <add>, %1, %cst [1] : vector<8x128xf32> to vector<8xf32>
    %3 = vector.shape_cast %2 : vector<8xf32> to vector<8x1xf32>
    %cst_1 = arith.constant 3.125000e-02 : f32
    %4 = vector.broadcast %cst_1 : f32 to vector<8x1xf32>
    %5 = arith.mulf %3, %4 : vector<8x1xf32>
    %6 = math.sqrt %5 : vector<8x1xf32>
    %cst_2 = arith.constant 9.99999993E-9 : f32
    %7 = vector.broadcast %cst_2 : f32 to vector<8x1xf32>
    %8 = arith.addf %6, %7 : vector<8x1xf32>
    %9 = tpu.reciprocal %8 {approx = true} : vector<8x1xf32> -> vector<8x1xf32>
    %10 = vector.broadcast %9 : vector<8x1xf32> to vector<8x128xf32>
    %11 = arith.mulf %0, %10 : vector<8x128xf32>
    %c0_3 = arith.constant 0 : index
    %c0_4 = arith.constant 0 : index
    %12 = vector.load %arg2[%c0_3, %c0_4] : memref<128x128xf32, #tpu.memory_space<vmem>>, vector<128x128xf32>
    %cst_5 = arith.constant dense<0.000000e+00> : vector<8x128xf32>
    %13 = tpu.matmul %11, %12, %cst_5 {dimension_numbers = #tpu.dot_dimension_numbers<[1], [0], [0], [1], [0, 0, 1, 1], [], []>} : vector<8x128xf32>, vector<128x128xf32>, vector<8x128xf32> -> vector<8x128xf32>
    %c0_6 = arith.constant 0 : index
    %c0_7 = arith.constant 0 : index
    %c0_8 = arith.constant 0 : index
    %14 = vector.load %arg4[%c0_6, %c0_7, %c0_8] : memref<4x1x128xf32, #tpu.memory_space<vmem>>, vector<1x1x128xf32>
    %15 = vector.shape_cast %14 : vector<1x1x128xf32> to vector<1x128xf32>
    %16 = vector.broadcast %15 : vector<1x128xf32> to vector<8x128xf32>
    %17 = arith.addf %13, %16 : vector<8x128xf32>
    %cst_9 = arith.constant 0.000000e+00 : f32
    %18 = vector.broadcast %cst_9 : f32 to vector<8x128xf32>
    %19 = arith.cmpf oge, %17, %18 : vector<8x128xf32>
    %cst_10 = arith.constant 2.000000e-01 : f32
    %20 = vector.broadcast %cst_10 : f32 to vector<8x128xf32>
    %21 = arith.mulf %20, %17 : vector<8x128xf32>
    %22 = arith.select %19, %17, %21 : vector<8x128xi1>, vector<8x128xf32>
    %cst_11 = arith.constant 1.41421354 : f32
    %23 = vector.broadcast %cst_11 : f32 to vector<8x128xf32>
    %24 = arith.mulf %22, %23 : vector<8x128xf32>
    %c0_12 = arith.constant 0 : index
    %c0_13 = arith.constant 0 : index
    %c0_14 = arith.constant 0 : index
    %25 = vector.load %arg3[%c0_12, %c0_13, %c0_14] : memref<3x128x128xf32, #tpu.memory_space<vmem>>, vector<1x128x128xf32>
    %26 = vector.shape_cast %25 : vector<1x128x128xf32> to vector<128x128xf32>
    %cst_15 = arith.constant dense<0.000000e+00> : vector<8x128xf32>
    %27 = tpu.matmul %24, %26, %cst_15 {dimension_numbers = #tpu.dot_dimension_numbers<[1], [0], [0], [1], [0, 0, 1, 1], [], []>} : vector<8x128xf32>, vector<128x128xf32>, vector<8x128xf32> -> vector<8x128xf32>
    %c1 = arith.constant 1 : index
    %c0_16 = arith.constant 0 : index
    %c0_17 = arith.constant 0 : index
    %28 = vector.load %arg4[%c1, %c0_16, %c0_17] : memref<4x1x128xf32, #tpu.memory_space<vmem>>, vector<1x1x128xf32>
    %29 = vector.shape_cast %28 : vector<1x1x128xf32> to vector<1x128xf32>
    %30 = vector.broadcast %29 : vector<1x128xf32> to vector<8x128xf32>
    %31 = arith.addf %27, %30 : vector<8x128xf32>
    %cst_18 = arith.constant 0.000000e+00 : f32
    %32 = vector.broadcast %cst_18 : f32 to vector<8x128xf32>
    %33 = arith.cmpf oge, %31, %32 : vector<8x128xf32>
    %cst_19 = arith.constant 2.000000e-01 : f32
    %34 = vector.broadcast %cst_19 : f32 to vector<8x128xf32>
    %35 = arith.mulf %34, %31 : vector<8x128xf32>
    %36 = arith.select %33, %31, %35 : vector<8x128xi1>, vector<8x128xf32>
    %cst_20 = arith.constant 1.41421354 : f32
    %37 = vector.broadcast %cst_20 : f32 to vector<8x128xf32>
    %38 = arith.mulf %36, %37 : vector<8x128xf32>
    %c1_21 = arith.constant 1 : index
    %c0_22 = arith.constant 0 : index
    %c0_23 = arith.constant 0 : index
    %39 = vector.load %arg3[%c1_21, %c0_22, %c0_23] : memref<3x128x128xf32, #tpu.memory_space<vmem>>, vector<1x128x128xf32>
    %40 = vector.shape_cast %39 : vector<1x128x128xf32> to vector<128x128xf32>
    %cst_24 = arith.constant dense<0.000000e+00> : vector<8x128xf32>
    %41 = tpu.matmul %38, %40, %cst_24 {dimension_numbers = #tpu.dot_dimension_numbers<[1], [0], [0], [1], [0, 0, 1, 1], [], []>} : vector<8x128xf32>, vector<128x128xf32>, vector<8x128xf32> -> vector<8x128xf32>
    %c2 = arith.constant 2 : index
    %c0_25 = arith.constant 0 : index
    %c0_26 = arith.constant 0 : index
    %42 = vector.load %arg4[%c2, %c0_25, %c0_26] : memref<4x1x128xf32, #tpu.memory_space<vmem>>, vector<1x1x128xf32>
    %43 = vector.shape_cast %42 : vector<1x1x128xf32> to vector<1x128xf32>
    %44 = vector.broadcast %43 : vector<1x128xf32> to vector<8x128xf32>
    %45 = arith.addf %41, %44 : vector<8x128xf32>
    %cst_27 = arith.constant 0.000000e+00 : f32
    %46 = vector.broadcast %cst_27 : f32 to vector<8x128xf32>
    %47 = arith.cmpf oge, %45, %46 : vector<8x128xf32>
    %cst_28 = arith.constant 2.000000e-01 : f32
    %48 = vector.broadcast %cst_28 : f32 to vector<8x128xf32>
    %49 = arith.mulf %48, %45 : vector<8x128xf32>
    %50 = arith.select %47, %45, %49 : vector<8x128xi1>, vector<8x128xf32>
    %cst_29 = arith.constant 1.41421354 : f32
    %51 = vector.broadcast %cst_29 : f32 to vector<8x128xf32>
    %52 = arith.mulf %50, %51 : vector<8x128xf32>
    %c2_30 = arith.constant 2 : index
    %c0_31 = arith.constant 0 : index
    %c0_32 = arith.constant 0 : index
    %53 = vector.load %arg3[%c2_30, %c0_31, %c0_32] : memref<3x128x128xf32, #tpu.memory_space<vmem>>, vector<1x128x128xf32>
    %54 = vector.shape_cast %53 : vector<1x128x128xf32> to vector<128x128xf32>
    %cst_33 = arith.constant dense<0.000000e+00> : vector<8x128xf32>
    %55 = tpu.matmul %52, %54, %cst_33 {dimension_numbers = #tpu.dot_dimension_numbers<[1], [0], [0], [1], [0, 0, 1, 1], [], []>} : vector<8x128xf32>, vector<128x128xf32>, vector<8x128xf32> -> vector<8x128xf32>
    %c3 = arith.constant 3 : index
    %c0_34 = arith.constant 0 : index
    %c0_35 = arith.constant 0 : index
    %56 = vector.load %arg4[%c3, %c0_34, %c0_35] : memref<4x1x128xf32, #tpu.memory_space<vmem>>, vector<1x1x128xf32>
    %57 = vector.shape_cast %56 : vector<1x1x128xf32> to vector<1x128xf32>
    %58 = vector.broadcast %57 : vector<1x128xf32> to vector<8x128xf32>
    %59 = arith.addf %55, %58 : vector<8x128xf32>
    %cst_36 = arith.constant 0.000000e+00 : f32
    %60 = vector.broadcast %cst_36 : f32 to vector<8x128xf32>
    %61 = arith.cmpf oge, %59, %60 : vector<8x128xf32>
    %cst_37 = arith.constant 2.000000e-01 : f32
    %62 = vector.broadcast %cst_37 : f32 to vector<8x128xf32>
    %63 = arith.mulf %62, %59 : vector<8x128xf32>
    %64 = arith.select %61, %59, %63 : vector<8x128xi1>, vector<8x128xf32>
    %cst_38 = arith.constant 1.41421354 : f32
    %65 = vector.broadcast %cst_38 : f32 to vector<8x128xf32>
    %66 = arith.mulf %64, %65 : vector<8x128xf32>
    %c0_39 = arith.constant 0 : index
    %c0_40 = arith.constant 0 : index
    %67 = vector.load %arg5[%c0_39, %c0_40] : memref<8x128xf32, #tpu.memory_space<vmem>>, vector<8x128xf32>
    tpu.vector_store %arg5[%c0_39, %c0_40], %66 {strides = array<i32>} : memref<8x128xf32, #tpu.memory_space<vmem>>, vector<8x128xf32>,
    return
  }
  func.func @transform_0(%arg0: i32) -> (i32, i32) {
    %c0_i32 = arith.constant 0 : i32
    %c0_i32_0 = arith.constant 0 : i32
    return %arg0, %c0_i32 : i32, i32
  }
  func.func @transform_1(%arg0: i32) -> (i32, i32) {
    %c0_i32 = arith.constant 0 : i32
    %c0_i32_0 = arith.constant 0 : i32
    %c0_i32_1 = arith.constant 0 : i32
    return %c0_i32, %c0_i32_0 : i32, i32
  }
  func.func @transform_2(%arg0: i32) -> (i32, i32, i32) {
    %c0_i32 = arith.constant 0 : i32
    %c0_i32_0 = arith.constant 0 : i32
    %c0_i32_1 = arith.constant 0 : i32
    %c0_i32_2 = arith.constant 0 : i32
    return %c0_i32, %c0_i32_0, %c0_i32_1 : i32, i32, i32
  }
  func.func @transform_3(%arg0: i32) -> (i32, i32, i32) {
    %c0_i32 = arith.constant 0 : i32
    %c0_i32_0 = arith.constant 0 : i32
    %c0_i32_1 = arith.constant 0 : i32
    %c0_i32_2 = arith.constant 0 : i32
    return %c0_i32, %c0_i32_0, %c0_i32_1 : i32, i32, i32
  }
  func.func @transform_4(%arg0: i32) -> (i32, i32) {
    %c0_i32 = arith.constant 0 : i32
    %c0_i32_0 = arith.constant 0 : i32
    return %arg0, %c0_i32 : i32, i32
  }
}

</mosaic_0001>

<llo_original>
// kernel: tpu_custom_call.1
$region0: #{tpu_custom_call.1}
  #allocation0 [shape = 'u32[]', space=smem, size = 0x4, offset = 0x4, fixed_abs, tag = 'smem constant byte address 0x4 - core index']
  #allocation1 [shape = 'u32[144,128]{1,0:T(1,128)}', space=vmem, size = 0x12000, scoped, tag = 'internal scratch']
  %s0 = inlined_call_operand.hbm [shape: f32[24,128], index: 0, kind: input, shape index: {}]
  %s1 = inlined_call_operand.hbm [shape: f32[128,128], index: 1, kind: input, shape index: {}]
  %s2 = inlined_call_operand.hbm [shape: f32[3,128,128], index: 2, kind: input, shape index: {}]
  %s3 = inlined_call_operand.vmem [shape: f32[4,1,128], index: 3, kind: input, shape index: {}]
  %s4 = inlined_call_operand.hbm [shape: f32[24,128], index: 4, kind: output, shape index: {}]
  %s5 = sld [smem:[#allocation0]]
  $region61: #{tpu_custom_call.1} parent=0
    _
  %s7 = ssub.s32 1, %s5
  %s8 = scalar_select 0, %s7, %s5
  $region1: #{tpu_custom_call.1} parent=0
    #allocation2 [shape = 'u8[8192]{0}', space=vmem, size = 0x2000, scoped, tag = 'input window, operand 0']
    #allocation3 [shape = 's32[2]{0}', space=sflag, size = 0x8, scoped, tag = 'scoped memory for tpu_custom_call.1']
    #allocation4 [shape = 's32[2]{0}', space=sflag, size = 0x8, scoped, tag = 'scoped memory for tpu_custom_call.1']
    #allocation5 [shape = 'u8[65536]{0}', space=vmem, size = 0x10000, scoped, tag = 'input window, operand 1, single buffered']
    #allocation6 [shape = 's32[1]{0}', space=sflag, size = 0x4, scoped, tag = 'scoped memory for tpu_custom_call.1']
    #allocation7 [shape = 'u8[196608]{0}', space=vmem, size = 0x30000, scoped, tag = 'input window, operand 2, single buffered']
    #allocation8 [shape = 'u8[8192]{0}', space=vmem, size = 0x2000, scoped, tag = 'output window, operand 0']
    %9 = vsyncpa [#allocation3], 0
    %s10 = scalar_lea.sflag [#allocation3], 1
    %11 = vsyncpa %s10, 0
    %12 = vsyncpa [#allocation6], 0
    %13 = vsyncpa [#allocation4], 0
    %s14 = scalar_lea.sflag [#allocation4], 1
    %15 = vsyncpa %s14, 0
    loop: start=0, step=1, limit=5
    $region2: #{tpu_custom_call.1} parent=1 // loop_pre_header
      _
    $region3: #{tpu_custom_call.1} parent=1 // loop_header
      %s17 = sphi 0, %s21
      %p18 = scmp.ge.s32.totalorder %s17, 5
      %s27 = sphi 0, %s29
      %s30 = sphi 0, %s27
      %s31 = sphi 0, %s30
      %s47 = sphi 0, %s31
      %s51 = sphi 0, %s51
      %s53 = sphi 0, %s51
      %s54 = sphi 0, %s53
      %s68 = sphi 0, %s54
      %s72 = sphi 0, %s72
      %s74 = sphi 0, %s72
      %s75 = sphi 0, %s74
      %s89 = sphi 0, %s75
      %s93 = sphi 0, %s93
      %s95 = sphi 0, %s93
      %s96 = sphi 0, %s95
      %s110 = sphi 0, %s96
      %s116 = sphi 0, %s118
      %s119 = sphi 0, %s116
      %s120 = sphi 0, %s119
      %s136 = sphi 0, %s120
    $region4: #{tpu_custom_call.1} parent=1 // loop_header_branch
      %20 = sbr.rel (%p18) target = $region8
    $region5: #{tpu_custom_call.1} parent=1 // loop_body
      %s22 = ssub.s32 %s17, 1
      %s23 = ssub.s32 %s17, 2
      %s24 = sadd.s32 %s17, 1
      %s25 = ssub.s32 %s17, %s24
      %p26 = scmp.eq.s32.totalorder %s25, 0
      %s28 = sadd.s32 %s27, 1
      %s29 = scalar_select %p26, %s27, %s28
      %p32 = pneg %p26
      %p33 = scmp.eq.s32.totalorder %s17, 2
      %p34 = por %p32, %p33
      %p35 = scmp.ne.s32.totalorder %s27, %s30
      %p36 = scmp.eq.s32.totalorder %s17, 0
      %p37 = por %p35, %p36
      %p38 = scmp.ne.s32.totalorder %s27, %s30
      %p39 = scmp.eq.s32.totalorder %s22, 2
      %p40 = por %p38, %p39
      %p41 = scmp.ne.s32.totalorder %s30, %s31
      %p42 = scmp.eq.s32.totalorder %s22, 0
      %p43 = por %p41, %p42
      %p44 = scmp.ne.s32.totalorder %s30, %s31
      %p45 = scmp.eq.s32.totalorder %s23, 2
      %p46 = por %p44, %p45
      %p48 = scmp.ne.s32.totalorder %s31, %s47
      %p49 = scmp.eq.s32.totalorder %s23, 0
      %p50 = por %p48, %p49
      %s52 = sadd.s32 %s51, 1
      %p55 = scmp.eq.s32.totalorder %s17, 2
      %p56 = scmp.ne.s32.totalorder %s51, %s53
      %p57 = scmp.eq.s32.totalorder %s17, 0
      %p58 = por %p56, %p57
      %p59 = scmp.ne.s32.totalorder %s51, %s53
      %p60 = scmp.eq.s32.totalorder %s22, 2
      %p61 = por %p59, %p60
      %p62 = scmp.ne.s32.totalorder %s53, %s54
      %p63 = scmp.eq.s32.totalorder %s22, 0
      %p64 = por %p62, %p63
      %p65 = scmp.ne.s32.totalorder %s53, %s54
      %p66 = scmp.eq.s32.totalorder %s23, 2
      %p67 = por %p65, %p66
      %p69 = scmp.ne.s32.totalorder %s54, %s68
      %p70 = scmp.eq.s32.totalorder %s23, 0
      %p71 = por %p69, %p70
      %s73 = sadd.s32 %s72, 1
      %p76 = scmp.eq.s32.totalorder %s17, 2
      %p77 = scmp.ne.s32.totalorder %s72, %s74
      %p78 = scmp.eq.s32.totalorder %s17, 0
      %p79 = por %p77, %p78
      %p80 = scmp.ne.s32.totalorder %s72, %s74
      %p81 = scmp.eq.s32.totalorder %s22, 2
      %p82 = por %p80, %p81
      %p83 = scmp.ne.s32.totalorder %s74, %s75
      %p84 = scmp.eq.s32.totalorder %s22, 0
      %p85 = por %p83, %p84
      %p86 = scmp.ne.s32.totalorder %s74, %s75
      %p87 = scmp.eq.s32.totalorder %s23, 2
      %p88 = por %p86, %p87
      %p90 = scmp.ne.s32.totalorder %s75, %s89
      %p91 = scmp.eq.s32.totalorder %s23, 0
      %p92 = por %p90, %p91
      %s94 = sadd.s32 %s93, 1
      %p97 = scmp.eq.s32.totalorder %s17, 2
      %p98 = scmp.ne.s32.totalorder %s93, %s95
      %p99 = scmp.eq.s32.totalorder %s17, 0
      %p100 = por %p98, %p99
      %p101 = scmp.ne.s32.totalorder %s93, %s95
      %p102 = scmp.eq.s32.totalorder %s22, 2
      %p103 = por %p101, %p102
      %p104 = scmp.ne.s32.totalorder %s95, %s96
      %p105 = scmp.eq.s32.totalorder %s22, 0
      %p106 = por %p104, %p105
      %p107 = scmp.ne.s32.totalorder %s95, %s96
      %p108 = scmp.eq.s32.totalorder %s23, 2
      %p109 = por %p107, %p108
      %p111 = scmp.ne.s32.totalorder %s96, %s110
      %p112 = scmp.eq.s32.totalorder %s23, 0
      %p113 = por %p111, %p112
      %s114 = ssub.s32 %s17, %s24
      %p115 = scmp.eq.s32.totalorder %s114, 0
      %s117 = sadd.s32 %s116, 1
      %s118 = scalar_select %p115, %s116, %s117
      %p121 = pneg %p115
      %p122 = scmp.eq.s32.totalorder %s17, 2
      %p123 = por %p121, %p122
      %p124 = scmp.ne.s32.totalorder %s116, %s119
      %p125 = scmp.eq.s32.totalorder %s17, 0
      %p126 = por %p124, %p125
      %p127 = scmp.ne.s32.totalorder %s116, %s119
      %p128 = scmp.eq.s32.totalorder %s22, 2
      %p129 = por %p127, %p128
      %p130 = scmp.ne.s32.totalorder %s119, %s120
      %p131 = scmp.eq.s32.totalorder %s22, 0
      %p132 = por %p130, %p131
      %p133 = scmp.ne.s32.totalorder %s119, %s120
      %p134 = scmp.eq.s32.totalorder %s23, 2
      %p135 = por %p133, %p134
      %p137 = scmp.ne.s32.totalorder %s120, %s136
      %p138 = scmp.eq.s32.totalorder %s23, 0
      %p139 = por %p137, %p138
      %p140 = scmp.le.s32.totalorder 1, %s17
      %p141 = scmp.lt.s32.totalorder %s17, 4
      %p142 = pnand %p140, %p141
      %p143 = pneg %p142
      // Predicated region
      $region9: #{tpu_custom_call.1} parent=5 // pred_check
        _
      $region10: #{tpu_custom_call.1} parent=5 // pred_check_branch
        %145 = sbr.rel (%p142) target = $region12
      $region11: #{tpu_custom_call.1} parent=5 // pred_region
        %s146 = ssub.s32 %s17, 1
        // Predicated region
        $region13: #{tpu_custom_call.1} parent=11 // pred_check
          %p147 = pneg %p64
        $region14: #{tpu_custom_call.1} parent=11 // pred_check_branch
          %149 = sbr.rel (%p147) target = $region16
        $region15: #{tpu_custom_call.1} parent=11 // pred_region
          %s151 = ssub.s32 2048, 2048
          %152 = vsyncadd [#allocation6], %s151
          %s153 = sshll.u32 [#allocation5], 4
          %s154 = int_to_ptr.vmem [resolvable:$true] %s153
          %159 = dma.hbm_to_vmem [thread:$0]  %s1, 2048, %s154, [#allocation6], 128, 128, 8
        $region16: #{tpu_custom_call.1} parent=11 // pred_fallthru
          _
        // Predicated region
        $region17: #{tpu_custom_call.1} parent=11 // pred_check
          %p160 = pneg %p85
        $region18: #{tpu_custom_call.1} parent=11 // pred_check_branch
          %162 = sbr.rel (%p160) target = $region20
        $region19: #{tpu_custom_call.1} parent=11 // pred_region
          %s164 = ssub.s32 6144, 6144
          %165 = vsyncadd [#allocation6], %s164
          %s166 = sshll.u32 [#allocation7], 4
          %s167 = int_to_ptr.vmem [resolvable:$true] %s166
          %172 = dma.hbm_to_vmem [thread:$0]  %s2, 6144, %s167, [#allocation6], 128, 128, 8
        $region20: #{tpu_custom_call.1} parent=11 // pred_fallthru
          _
        // Predicated region
        $region21: #{tpu_custom_call.1} parent=11 // pred_check
          %p173 = pneg %p106
        $region22: #{tpu_custom_call.1} parent=11 // pred_check_branch
          %175 = sbr.rel (%p173) target = $region24
        $region23: #{tpu_custom_call.1} parent=11 // pred_region
          _
        $region24: #{tpu_custom_call.1} parent=11 // pred_fallthru
          _
      $region12: #{tpu_custom_call.1} parent=5 // pred_fallthru
        _
      %p176 = scmp.lt.s32.totalorder %s17, 3
      // Predicated region
      $region25: #{tpu_custom_call.1} parent=5 // pred_check
        %p177 = pneg %p176
      $region26: #{tpu_custom_call.1} parent=5 // pred_check_branch
        %179 = sbr.rel (%p177) target = $region28
      $region27: #{tpu_custom_call.1} parent=5 // pred_region
        // Predicated region
        $region29: #{tpu_custom_call.1} parent=27 // pred_check
          %p180 = pneg %p37
        $region30: #{tpu_custom_call.1} parent=27 // pred_check_branch
          %182 = sbr.rel (%p180) target = $region32
        $region31: #{tpu_custom_call.1} parent=27 // pred_region
          %s183 = sand.u32 %s27, 1
          %s184 = scalar_lea.sflag [#allocation3], %s183
          %s185 = sand.u32 %s27, 1
          %s186 = smul.addr %s185, 8
          %s187 = scalar_lea.vmem [#allocation2], %s186
          %s189 = ssub.s32 128, 128
          %190 = vsyncadd %s184, %s189
          %s191 = smul.addr %s17, 128
          %s192 = scalar_lea.hbm %s0, %s191
          %s194 = sshll.u32 %s187, 4
          %s195 = int_to_ptr.vmem [resolvable:$true] %s194
          %197 = dma.hbm_to_vmem [thread:$0]  %s192, 128, %s195, %s184
        $region32: #{tpu_custom_call.1} parent=27 // pred_fallthru
          _
      $region28: #{tpu_custom_call.1} parent=5 // pred_fallthru
        _
      %p198 = scmp.le.s32.totalorder 1, %s17
      %p199 = scmp.lt.s32.totalorder %s17, 4
      %p200 = pnand %p198, %p199
      %p201 = pneg %p200
      // Predicated region
      $region33: #{tpu_custom_call.1} parent=5 // pred_check
        _
      $region34: #{tpu_custom_call.1} parent=5 // pred_check_branch
        %203 = sbr.rel (%p200) target = $region36
      $region35: #{tpu_custom_call.1} parent=5 // pred_region
        %s204 = ssub.s32 %s17, 1
        %s205 = sand.u32 %s30, 1
        %s206 = scalar_lea.sflag [#allocation3], %s205
        %s207 = sand.u32 %s30, 1
        %s208 = smul.addr %s207, 8
        %s209 = scalar_lea.vmem [#allocation2], %s208
        // Predicated region
        $region37: #{tpu_custom_call.1} parent=35 // pred_check
          %p210 = pneg %p43
        $region38: #{tpu_custom_call.1} parent=35 // pred_check_branch
          %212 = sbr.rel (%p210) target = $region40
        $region39: #{tpu_custom_call.1} parent=35 // pred_region
          %213 = dma.done %s206, 128
        $region40: #{tpu_custom_call.1} parent=35 // pred_fallthru
          _
        // Predicated region
        $region41: #{tpu_custom_call.1} parent=35 // pred_check
          %p214 = pneg %p64
        $region42: #{tpu_custom_call.1} parent=35 // pred_check_branch
          %216 = sbr.rel (%p214) target = $region44
        $region43: #{tpu_custom_call.1} parent=35 // pred_region
          %217 = dma.done [#allocation6], 2048
        $region44: #{tpu_custom_call.1} parent=35 // pred_fallthru
          _
        // Predicated region
        $region45: #{tpu_custom_call.1} parent=35 // pred_check
          %p218 = pneg %p85
        $region46: #{tpu_custom_call.1} parent=35 // pred_check_branch
          %220 = sbr.rel (%p218) target = $region48
        $region47: #{tpu_custom_call.1} parent=35 // pred_region
          %221 = dma.done [#allocation6], 6144
        $region48: #{tpu_custom_call.1} parent=35 // pred_fallthru
          _
        %s222 = sand.u32 %s30, 1
        %s223 = scalar_lea.sflag [#allocation3], %s222
        %s224 = sand.u32 %s30, 1
        %s225 = smul.addr %s224, 8
        %s226 = scalar_lea.vmem [#allocation2], %s225
        %p227 = pneg %p43
        %p228 = pneg %p40
        %p229 = pneg %p64
        %p230 = pneg %p61
        %p231 = pneg %p85
        %p232 = pneg %p82
        %p233 = pneg %p106
        %p234 = pneg %p103
        %p235 = pneg %p132
        %p236 = pneg %p129
        %s237 = sand.u32 %s119, 1
        %s238 = scalar_lea.sflag [#allocation4], %s237
        %s239 = sand.u32 %s119, 1
        %s240 = smul.addr %s239, 8
        %s241 = scalar_lea.vmem [#allocation8], %s240
        %v242 = vld [vmem:[%s209] sm:$0xff]
        %v243 = vmul.f32 %v242, %v242
        %244 = vadd.xlane.f32.xlu0 %v243
        %v245 = vpop.xlane.xlu0 %244
        %v246 = vmul.f32 %v245, 0.03125
        %v247 = vrsqrt.pop %v246
        %v248 = vmul.f32 %v246, %v247
        %vm249 = vcmp.eq.f32.partialorder %v246, inf
        %v250 = vsel %vm249, %v246, %v248
        %vm251 = vcmp.eq.f32.partialorder %v246, 0.0
        %v252 = vand.u32 %v246, 2147483648
        %v253 = vsel %vm251, %v252, %v250
        %v254 = vadd.f32 %v253, 1e-08
        %v255 = vrcp.pop %v254
        %v256 = vmul.f32 %v242, %v255
        %v257 = vld [vmem:[#allocation5] sm:$0xff]
        %v258 = vld [vmem:[#allocation5 + $0x8] sm:$0xff]
        %v259 = vld [vmem:[#allocation5 + $0x10] sm:$0xff]
        %v260 = vld [vmem:[#allocation5 + $0x18] sm:$0xff]
        %v261 = vld [vmem:[#allocation5 + $0x20] sm:$0xff]
        %v262 = vld [vmem:[#allocation5 + $0x28] sm:$0xff]
        %v263 = vld [vmem:[#allocation5 + $0x30] sm:$0xff]
        %v264 = vld [vmem:[#allocation5 + $0x38] sm:$0xff]
        %v265 = vld [vmem:[#allocation5 + $0x40] sm:$0xff]
        %v266 = vld [vmem:[#allocation5 + $0x48] sm:$0xff]
        %v267 = vld [vmem:[#allocation5 + $0x50] sm:$0xff]
        %v268 = vld [vmem:[#allocation5 + $0x58] sm:$0xff]
        %v269 = vld [vmem:[#allocation5 + $0x60] sm:$0xff]
        %v270 = vld [vmem:[#allocation5 + $0x68] sm:$0xff]
        %v271 = vld [vmem:[#allocation5 + $0x70] sm:$0xff]
        %v272 = vld [vmem:[#allocation5 + $0x78] sm:$0xff]
        %v273 = vld [vmem:[%s3] sm:$0x1]
        %v275 = vlaneseq
        %v276 = vshrl.u32 %v275, 7
        %v277 = vsub.s32 0, %v276
        %v278 = vrot.slane %v273, %v277
        %280 = vmatprep.subr.mxu0 0.0
        %281 = vmatpush1.msra.mxu0 %v257
        %282 = vmatprep.subr.mxu0 0.0
        %283 = vmatpush1.msra.mxu0 %v258
        %284 = vmatprep.subr.mxu0 0.0
        %285 = vmatpush1.msra.mxu0 %v259
        %286 = vmatprep.subr.mxu0 0.0
        %287 = vmatpush1.msra.mxu0 %v260
        %288 = vmatprep.subr.mxu0 0.0
        %289 = vmatpush1.msra.mxu0 %v261
        %290 = vmatprep.subr.mxu0 0.0
        %291 = vmatpush1.msra.mxu0 %v262
        %292 = vmatprep.subr.mxu0 0.0
        %293 = vmatpush1.msra.mxu0 %v263
        %294 = vmatprep.subr.mxu0 0.0
        %295 = vmatpush1.msra.mxu0 %v264
        %296 = vmatprep.subr.mxu0 0.0
        %297 = vmatpush1.msra.mxu0 %v265
        %298 = vmatprep.subr.mxu0 0.0
        %299 = vmatpush1.msra.mxu0 %v266
        %300 = vmatprep.subr.mxu0 0.0
        %301 = vmatpush1.msra.mxu0 %v267
        %302 = vmatprep.subr.mxu0 0.0
        %303 = vmatpush1.msra.mxu0 %v268
        %304 = vmatprep.subr.mxu0 0.0
        %305 = vmatpush1.msra.mxu0 %v269
        %306 = vmatprep.subr.mxu0 0.0
        %307 = vmatpush1.msra.mxu0 %v270
        %308 = vmatprep.subr.mxu0 0.0
        %309 = vmatpush1.msra.mxu0 %v271
        %310 = vmatprep.subr.mxu0 0.0
        %311 = vmatpush1.msra.mxu0 %v272
        %312 = vmatprep.subr.mxu0 0.0
        %313 = vmatpush1.msra.mxu0 0.0
        %314 = vmatprep.subr.mxu0 0.0
        %315 = vmatpush1.msra.mxu0 0.0
        %316 = vmatprep.subr.mxu0 0.0
        %317 = vmatpush1.msra.mxu0 0.0
        %318 = vmatprep.subr.mxu0 0.0
        %319 = vmatpush1.msra.mxu0 0.0
        %320 = vmatprep.subr.mxu0 0.0
        %321 = vmatpush1.msra.mxu0 0.0
        %322 = vmatprep.subr.mxu0 0.0
        %323 = vmatpush1.msra.mxu0 0.0
        %324 = vmatprep.subr.mxu0 0.0
        %325 = vmatpush1.msra.mxu0 0.0
        %326 = vmatprep.subr.mxu0 0.0
        %327 = vmatpush1.msra.mxu0 0.0
        %328 = vmatprep.subr.mxu0 0.0
        %329 = vmatpush1.msra.mxu0 0.0
        %330 = vmatprep.subr.mxu0 0.0
        %331 = vmatpush1.msra.mxu0 0.0
        %332 = vmatprep.subr.mxu0 0.0
        %333 = vmatpush1.msra.mxu0 0.0
        %334 = vmatprep.subr.mxu0 0.0
        %335 = vmatpush1.msra.mxu0 0.0
        %336 = vmatprep.subr.mxu0 0.0
        %337 = vmatpush1.msra.mxu0 0.0
        %338 = vmatprep.subr.mxu0 0.0
        %339 = vmatpush1.msra.mxu0 0.0
        %340 = vmatprep.subr.mxu0 0.0
        %341 = vmatpush1.msra.mxu0 0.0
        %342 = vmatprep.subr.mxu0 0.0
        %343 = vmatpush1.msra.mxu0 0.0
        %344 = vmatprep.mubr.f32.mxu0 0.0
        %345 = vmatmul.mubr.f32.gmra.mrb[0].mxu0 %v256
        %v346 = vpop.f32.mrb[0].mxu0
        %v347 = vadd.f32 %v278, %v346
        %v348 = vpop.f32.mrb[0].mxu0
        %349 = vdwg.mxu0
        %vm350 = vcmp.ge.f32.partialorder %v347, 0.0
        %v351 = vmul.f32 %v347, 0.2
        %v352 = vsel %vm350, %v347, %v351
        %v353 = vmul.f32 %v352, 1.4142135
        %v354 = vld [vmem:[#allocation7] sm:$0xff]
        %v355 = vld [vmem:[#allocation7 + $0x8] sm:$0xff]
        %v356 = vld [vmem:[#allocation7 + $0x10] sm:$0xff]
        %v357 = vld [vmem:[#allocation7 + $0x18] sm:$0xff]
        %v358 = vld [vmem:[#allocation7 + $0x20] sm:$0xff]
        %v359 = vld [vmem:[#allocation7 + $0x28] sm:$0xff]
        %v360 = vld [vmem:[#allocation7 + $0x30] sm:$0xff]
        %v361 = vld [vmem:[#allocation7 + $0x38] sm:$0xff]
        %v362 = vld [vmem:[#allocation7 + $0x40] sm:$0xff]
        %v363 = vld [vmem:[#allocation7 + $0x48] sm:$0xff]
        %v364 = vld [vmem:[#allocation7 + $0x50] sm:$0xff]
        %v365 = vld [vmem:[#allocation7 + $0x58] sm:$0xff]
        %v366 = vld [vmem:[#allocation7 + $0x60] sm:$0xff]
        %v367 = vld [vmem:[#allocation7 + $0x68] sm:$0xff]
        %v368 = vld [vmem:[#allocation7 + $0x70] sm:$0xff]
        %v369 = vld [vmem:[#allocation7 + $0x78] sm:$0xff]
        %s370 = scalar_lea.vmem %s3, 1
        %v371 = vld [vmem:[%s370] sm:$0x1]
        %v373 = vlaneseq
        %v374 = vshrl.u32 %v373, 7
        %v375 = vsub.s32 0, %v374
        %v376 = vrot.slane %v371, %v375
        %378 = vmatprep.subr.mxu0 0.0
        %379 = vmatpush1.msra.mxu0 %v354
        %380 = vmatprep.subr.mxu0 0.0
        %381 = vmatpush1.msra.mxu0 %v355
        %382 = vmatprep.subr.mxu0 0.0
        %383 = vmatpush1.msra.mxu0 %v356
        %384 = vmatprep.subr.mxu0 0.0
        %385 = vmatpush1.msra.mxu0 %v357
        %386 = vmatprep.subr.mxu0 0.0
        %387 = vmatpush1.msra.mxu0 %v358
        %388 = vmatprep.subr.mxu0 0.0
        %389 = vmatpush1.msra.mxu0 %v359
        %390 = vmatprep.subr.mxu0 0.0
        %391 = vmatpush1.msra.mxu0 %v360
        %392 = vmatprep.subr.mxu0 0.0
        %393 = vmatpush1.msra.mxu0 %v361
        %394 = vmatprep.subr.mxu0 0.0
        %395 = vmatpush1.msra.mxu0 %v362
        %396 = vmatprep.subr.mxu0 0.0
        %397 = vmatpush1.msra.mxu0 %v363
        %398 = vmatprep.subr.mxu0 0.0
        %399 = vmatpush1.msra.mxu0 %v364
        %400 = vmatprep.subr.mxu0 0.0
        %401 = vmatpush1.msra.mxu0 %v365
        %402 = vmatprep.subr.mxu0 0.0
        %403 = vmatpush1.msra.mxu0 %v366
        %404 = vmatprep.subr.mxu0 0.0
        %405 = vmatpush1.msra.mxu0 %v367
        %406 = vmatprep.subr.mxu0 0.0
        %407 = vmatpush1.msra.mxu0 %v368
        %408 = vmatprep.subr.mxu0 0.0
        %409 = vmatpush1.msra.mxu0 %v369
        %410 = vmatprep.subr.mxu0 0.0
        %411 = vmatpush1.msra.mxu0 0.0
        %412 = vmatprep.subr.mxu0 0.0
        %413 = vmatpush1.msra.mxu0 0.0
        %414 = vmatprep.subr.mxu0 0.0
        %415 = vmatpush1.msra.mxu0 0.0
        %416 = vmatprep.subr.mxu0 0.0
        %417 = vmatpush1.msra.mxu0 0.0
        %418 = vmatprep.subr.mxu0 0.0
        %419 = vmatpush1.msra.mxu0 0.0
        %420 = vmatprep.subr.mxu0 0.0
        %421 = vmatpush1.msra.mxu0 0.0
        %422 = vmatprep.subr.mxu0 0.0
        %423 = vmatpush1.msra.mxu0 0.0
        %424 = vmatprep.subr.mxu0 0.0
        %425 = vmatpush1.msra.mxu0 0.0
        %426 = vmatprep.subr.mxu0 0.0
        %427 = vmatpush1.msra.mxu0 0.0
        %428 = vmatprep.subr.mxu0 0.0
        %429 = vmatpush1.msra.mxu0 0.0
        %430 = vmatprep.subr.mxu0 0.0
        %431 = vmatpush1.msra.mxu0 0.0
        %432 = vmatprep.subr.mxu0 0.0
        %433 = vmatpush1.msra.mxu0 0.0
        %434 = vmatprep.subr.mxu0 0.0
        %435 = vmatpush1.msra.mxu0 0.0
        %436 = vmatprep.subr.mxu0 0.0
        %437 = vmatpush1.msra.mxu0 0.0
        %438 = vmatprep.subr.mxu0 0.0
        %439 = vmatpush1.msra.mxu0 0.0
        %440 = vmatprep.subr.mxu0 0.0
        %441 = vmatpush1.msra.mxu0 0.0
        %442 = vmatprep.mubr.f32.mxu0 0.0
        %443 = vmatmul.mubr.f32.gmra.mrb[0].mxu0 %v353
        %v444 = vpop.f32.mrb[0].mxu0
        %v445 = vadd.f32 %v376, %v444
        %v446 = vpop.f32.mrb[0].mxu0
        %447 = vdwg.mxu0
        %vm448 = vcmp.ge.f32.partialorder %v445, 0.0
        %v449 = vmul.f32 %v445, 0.2
        %v450 = vsel %vm448, %v445, %v449
        %v451 = vmul.f32 %v450, 1.4142135
        %s452 = scalar_lea.vmem [#allocation7], 128
        %v453 = vld [vmem:[%s452] sm:$0xff]
        %v454 = vld [vmem:[%s452 + $0x8] sm:$0xff]
        %v455 = vld [vmem:[%s452 + $0x10] sm:$0xff]
        %v456 = vld [vmem:[%s452 + $0x18] sm:$0xff]
        %v457 = vld [vmem:[%s452 + $0x20] sm:$0xff]
        %v458 = vld [vmem:[%s452 + $0x28] sm:$0xff]
        %v459 = vld [vmem:[%s452 + $0x30] sm:$0xff]
        %v460 = vld [vmem:[%s452 + $0x38] sm:$0xff]
        %v461 = vld [vmem:[%s452 + $0x40] sm:$0xff]
        %v462 = vld [vmem:[%s452 + $0x48] sm:$0xff]
        %v463 = vld [vmem:[%s452 + $0x50] sm:$0xff]
        %v464 = vld [vmem:[%s452 + $0x58] sm:$0xff]
        %v465 = vld [vmem:[%s452 + $0x60] sm:$0xff]
        %v466 = vld [vmem:[%s452 + $0x68] sm:$0xff]
        %v467 = vld [vmem:[%s452 + $0x70] sm:$0xff]
        %v468 = vld [vmem:[%s452 + $0x78] sm:$0xff]
        %s469 = scalar_lea.vmem %s3, 2
        %v470 = vld [vmem:[%s469] sm:$0x1]
        %v472 = vlaneseq
        %v473 = vshrl.u32 %v472, 7
        %v474 = vsub.s32 0, %v473
        %v475 = vrot.slane %v470, %v474
        %477 = vmatprep.subr.mxu0 0.0
        %478 = vmatpush1.msra.mxu0 %v453
        %479 = vmatprep.subr.mxu0 0.0
        %480 = vmatpush1.msra.mxu0 %v454
        %481 = vmatprep.subr.mxu0 0.0
        %482 = vmatpush1.msra.mxu0 %v455
        %483 = vmatprep.subr.mxu0 0.0
        %484 = vmatpush1.msra.mxu0 %v456
        %485 = vmatprep.subr.mxu0 0.0
        %486 = vmatpush1.msra.mxu0 %v457
        %487 = vmatprep.subr.mxu0 0.0
        %488 = vmatpush1.msra.mxu0 %v458
        %489 = vmatprep.subr.mxu0 0.0
        %490 = vmatpush1.msra.mxu0 %v459
        %491 = vmatprep.subr.mxu0 0.0
        %492 = vmatpush1.msra.mxu0 %v460
        %493 = vmatprep.subr.mxu0 0.0
        %494 = vmatpush1.msra.mxu0 %v461
        %495 = vmatprep.subr.mxu0 0.0
        %496 = vmatpush1.msra.mxu0 %v462
        %497 = vmatprep.subr.mxu0 0.0
        %498 = vmatpush1.msra.mxu0 %v463
        %499 = vmatprep.subr.mxu0 0.0
        %500 = vmatpush1.msra.mxu0 %v464
        %501 = vmatprep.subr.mxu0 0.0
        %502 = vmatpush1.msra.mxu0 %v465
        %503 = vmatprep.subr.mxu0 0.0
        %504 = vmatpush1.msra.mxu0 %v466
        %505 = vmatprep.subr.mxu0 0.0
        %506 = vmatpush1.msra.mxu0 %v467
        %507 = vmatprep.subr.mxu0 0.0
        %508 = vmatpush1.msra.mxu0 %v468
        %509 = vmatprep.subr.mxu0 0.0
        %510 = vmatpush1.msra.mxu0 0.0
        %511 = vmatprep.subr.mxu0 0.0
        %512 = vmatpush1.msra.mxu0 0.0
        %513 = vmatprep.subr.mxu0 0.0
        %514 = vmatpush1.msra.mxu0 0.0
        %515 = vmatprep.subr.mxu0 0.0
        %516 = vmatpush1.msra.mxu0 0.0
        %517 = vmatprep.subr.mxu0 0.0
        %518 = vmatpush1.msra.mxu0 0.0
        %519 = vmatprep.subr.mxu0 0.0
        %520 = vmatpush1.msra.mxu0 0.0
        %521 = vmatprep.subr.mxu0 0.0
        %522 = vmatpush1.msra.mxu0 0.0
        %523 = vmatprep.subr.mxu0 0.0
        %524 = vmatpush1.msra.mxu0 0.0
        %525 = vmatprep.subr.mxu0 0.0
        %526 = vmatpush1.msra.mxu0 0.0
        %527 = vmatprep.subr.mxu0 0.0
        %528 = vmatpush1.msra.mxu0 0.0
        %529 = vmatprep.subr.mxu0 0.0
        %530 = vmatpush1.msra.mxu0 0.0
        %531 = vmatprep.subr.mxu0 0.0
        %532 = vmatpush1.msra.mxu0 0.0
        %533 = vmatprep.subr.mxu0 0.0
        %534 = vmatpush1.msra.mxu0 0.0
        %535 = vmatprep.subr.mxu0 0.0
        %536 = vmatpush1.msra.mxu0 0.0
        %537 = vmatprep.subr.mxu0 0.0
        %538 = vmatpush1.msra.mxu0 0.0
        %539 = vmatprep.subr.mxu0 0.0
        %540 = vmatpush1.msra.mxu0 0.0
        %541 = vmatprep.mubr.f32.mxu0 0.0
        %542 = vmatmul.mubr.f32.gmra.mrb[0].mxu0 %v451
        %v543 = vpop.f32.mrb[0].mxu0
        %v544 = vadd.f32 %v475, %v543
        %v545 = vpop.f32.mrb[0].mxu0
        %546 = vdwg.mxu0
        %vm547 = vcmp.ge.f32.partialorder %v544, 0.0
        %v548 = vmul.f32 %v544, 0.2
        %v549 = vsel %vm547, %v544, %v548
        %v550 = vmul.f32 %v549, 1.4142135
        %s551 = scalar_lea.vmem [#allocation7], 256
        %v552 = vld [vmem:[%s551] sm:$0xff]
        %v553 = vld [vmem:[%s551 + $0x8] sm:$0xff]
        %v554 = vld [vmem:[%s551 + $0x10] sm:$0xff]
        %v555 = vld [vmem:[%s551 + $0x18] sm:$0xff]
        %v556 = vld [vmem:[%s551 + $0x20] sm:$0xff]
        %v557 = vld [vmem:[%s551 + $0x28] sm:$0xff]
        %v558 = vld [vmem:[%s551 + $0x30] sm:$0xff]
        %v559 = vld [vmem:[%s551 + $0x38] sm:$0xff]
        %v560 = vld [vmem:[%s551 + $0x40] sm:$0xff]
        %v561 = vld [vmem:[%s551 + $0x48] sm:$0xff]
        %v562 = vld [vmem:[%s551 + $0x50] sm:$0xff]
        %v563 = vld [vmem:[%s551 + $0x58] sm:$0xff]
        %v564 = vld [vmem:[%s551 + $0x60] sm:$0xff]
        %v565 = vld [vmem:[%s551 + $0x68] sm:$0xff]
        %v566 = vld [vmem:[%s551 + $0x70] sm:$0xff]
        %v567 = vld [vmem:[%s551 + $0x78] sm:$0xff]
        %s568 = scalar_lea.vmem %s3, 3
        %v569 = vld [vmem:[%s568] sm:$0x1]
        %v571 = vlaneseq
        %v572 = vshrl.u32 %v571, 7
        %v573 = vsub.s32 0, %v572
        %v574 = vrot.slane %v569, %v573
        %576 = vmatprep.subr.mxu0 0.0
        %577 = vmatpush1.msra.mxu0 %v552
        %578 = vmatprep.subr.mxu0 0.0
        %579 = vmatpush1.msra.mxu0 %v553
        %580 = vmatprep.subr.mxu0 0.0
        %581 = vmatpush1.msra.mxu0 %v554
        %582 = vmatprep.subr.mxu0 0.0
        %583 = vmatpush1.msra.mxu0 %v555
        %584 = vmatprep.subr.mxu0 0.0
        %585 = vmatpush1.msra.mxu0 %v556
        %586 = vmatprep.subr.mxu0 0.0
        %587 = vmatpush1.msra.mxu0 %v557
        %588 = vmatprep.subr.mxu0 0.0
        %589 = vmatpush1.msra.mxu0 %v558
        %590 = vmatprep.subr.mxu0 0.0
        %591 = vmatpush1.msra.mxu0 %v559
        %592 = vmatprep.subr.mxu0 0.0
        %593 = vmatpush1.msra.mxu0 %v560
        %594 = vmatprep.subr.mxu0 0.0
        %595 = vmatpush1.msra.mxu0 %v561
        %596 = vmatprep.subr.mxu0 0.0
        %597 = vmatpush1.msra.mxu0 %v562
        %598 = vmatprep.subr.mxu0 0.0
        %599 = vmatpush1.msra.mxu0 %v563
        %600 = vmatprep.subr.mxu0 0.0
        %601 = vmatpush1.msra.mxu0 %v564
        %602 = vmatprep.subr.mxu0 0.0
        %603 = vmatpush1.msra.mxu0 %v565
        %604 = vmatprep.subr.mxu0 0.0
        %605 = vmatpush1.msra.mxu0 %v566
        %606 = vmatprep.subr.mxu0 0.0
        %607 = vmatpush1.msra.mxu0 %v567
        %608 = vmatprep.subr.mxu0 0.0
        %609 = vmatpush1.msra.mxu0 0.0
        %610 = vmatprep.subr.mxu0 0.0
        %611 = vmatpush1.msra.mxu0 0.0
        %612 = vmatprep.subr.mxu0 0.0
        %613 = vmatpush1.msra.mxu0 0.0
        %614 = vmatprep.subr.mxu0 0.0
        %615 = vmatpush1.msra.mxu0 0.0
        %616 = vmatprep.subr.mxu0 0.0
        %617 = vmatpush1.msra.mxu0 0.0
        %618 = vmatprep.subr.mxu0 0.0
        %619 = vmatpush1.msra.mxu0 0.0
        %620 = vmatprep.subr.mxu0 0.0
        %621 = vmatpush1.msra.mxu0 0.0
        %622 = vmatprep.subr.mxu0 0.0
        %623 = vmatpush1.msra.mxu0 0.0
        %624 = vmatprep.subr.mxu0 0.0
        %625 = vmatpush1.msra.mxu0 0.0
        %626 = vmatprep.subr.mxu0 0.0
        %627 = vmatpush1.msra.mxu0 0.0
        %628 = vmatprep.subr.mxu0 0.0
        %629 = vmatpush1.msra.mxu0 0.0
        %630 = vmatprep.subr.mxu0 0.0
        %631 = vmatpush1.msra.mxu0 0.0
        %632 = vmatprep.subr.mxu0 0.0
        %633 = vmatpush1.msra.mxu0 0.0
        %634 = vmatprep.subr.mxu0 0.0
        %635 = vmatpush1.msra.mxu0 0.0
        %636 = vmatprep.subr.mxu0 0.0
        %637 = vmatpush1.msra.mxu0 0.0
        %638 = vmatprep.subr.mxu0 0.0
        %639 = vmatpush1.msra.mxu0 0.0
        %640 = vmatprep.mubr.f32.mxu0 0.0
        %641 = vmatmul.mubr.f32.gmra.mrb[0].mxu0 %v550
        %v642 = vpop.f32.mrb[0].mxu0
        %v643 = vadd.f32 %v574, %v642
        %v644 = vpop.f32.mrb[0].mxu0
        %645 = vdwg.mxu0
        %vm646 = vcmp.ge.f32.partialorder %v643, 0.0
        %v647 = vmul.f32 %v643, 0.2
        %v648 = vsel %vm646, %v643, %v647
        %v649 = vmul.f32 %v648, 1.4142135
        %650 = vst [vmem:[%s241] sm:$0xff] %v649
        %s651 = sand.u32 %s119, 1
        %s652 = scalar_lea.sflag [#allocation4], %s651
        %s653 = sand.u32 %s119, 1
        %s654 = smul.addr %s653, 8
        %s655 = scalar_lea.vmem [#allocation8], %s654
        // Predicated region
        $region49: #{tpu_custom_call.1} parent=35 // pred_check
          %p656 = pneg %p129
        $region50: #{tpu_custom_call.1} parent=35 // pred_check_branch
          %658 = sbr.rel (%p656) target = $region52
        $region51: #{tpu_custom_call.1} parent=35 // pred_region
          %s660 = ssub.s32 128, 128
          %661 = vsyncadd %s652, %s660
          %s662 = smul.addr %s22, 128
          %s663 = scalar_lea.hbm %s4, %s662
          %s665 = sshll.u32 %s655, 4
          %s666 = int_to_ptr.vmem [resolvable:$true] %s665
          %668 = dma.vmem_to_hbm [thread:$0]  %s666, 128, %s663, %s652
        $region52: #{tpu_custom_call.1} parent=35 // pred_fallthru
          _
      $region36: #{tpu_custom_call.1} parent=5 // pred_fallthru
        _
      %p669 = scmp.le.s32.totalorder 2, %s17
      // Predicated region
      $region53: #{tpu_custom_call.1} parent=5 // pred_check
        %p670 = pneg %p669
      $region54: #{tpu_custom_call.1} parent=5 // pred_check_branch
        %672 = sbr.rel (%p670) target = $region56
      $region55: #{tpu_custom_call.1} parent=5 // pred_region
        %s673 = ssub.s32 %s17, 2
        // Predicated region
        $region57: #{tpu_custom_call.1} parent=55 // pred_check
          %p674 = pneg %p135
        $region58: #{tpu_custom_call.1} parent=55 // pred_check_branch
          %676 = sbr.rel (%p674) target = $region60
        $region59: #{tpu_custom_call.1} parent=55 // pred_region
          %s677 = sand.u32 %s120, 1
          %s678 = scalar_lea.sflag [#allocation4], %s677
          %s679 = sand.u32 %s120, 1
          %s680 = smul.addr %s679, 8
          %s681 = scalar_lea.vmem [#allocation8], %s680
          %682 = dma.done %s678, 128
        $region60: #{tpu_custom_call.1} parent=55 // pred_fallthru
          _
      $region56: #{tpu_custom_call.1} parent=5 // pred_fallthru
        _
    $region6: #{tpu_custom_call.1} parent=1 // loop_footer
      %s21 = sadd.s32 1, %s17
    $region7: #{tpu_custom_call.1} parent=1 // loop_footer_branch
      %16 = sbr.rel target = $region3
    $region8: #{tpu_custom_call.1} parent=1 // loop_exit
      _
    %683 = vsyncpa [#allocation3], 1
    %s684 = scalar_lea.sflag [#allocation3], 1
    %685 = vsyncpa %s684, 1
    %686 = vsyncpa [#allocation6], 1
    %687 = vsyncpa [#allocation4], 1
    %s688 = scalar_lea.sflag [#allocation4], 1
    %689 = vsyncpa %s688, 1

</llo_original>
